<compile_context>
chip_gen: v5e
topology: v5e:2x2
jax: 0.10.0
libtpu: 0.0.40
codegen_flags: <defaults>
</compile_context>

<pallas_src>
import functools

import jax
import jax.numpy as jnp
from jax import lax
from jax.experimental import pallas as pl
from jax.experimental.pallas import tpu as pltpu


def _vmem_capacity_bytes():
    try:
        return int(pltpu.get_tpu_info().vmem_capacity_bytes)
    except Exception:
        return 64 * 1024 * 1024  # conservative fallback (v7x per-TC physical VMEM)


def _supports_bf16_valu():
    try:
        kind = jax.devices()[0].device_kind.lower()
    except Exception:
        return False
    # bf16 VALU exists on v6e / v7x; not on v4 / v5e.
    return ("v6" in kind) or ("v7" in kind)


def _hinge_kernel(logits_ref, labels_ref, partial_ref, *, batch_size, block_rows,
                  upcast):
    # logits_ref: (TB, C) native dtype; labels_ref: (TB, 1) int32
    # partial_ref: (1, 8, 128) f32 — this block's partial sum, lane-dense store.
    logits = logits_ref[...]
    if upcast:  # only on chips without bf16 VALU (v5e); f32 inputs are untouched
        logits = logits.astype(jnp.float32)
    labels = labels_ref[...]                                  # (TB, 1) int32

    tb, c = logits.shape
    col = lax.broadcasted_iota(jnp.int32, (tb, c), 1)         # class index per lane
    is_true = col == labels                                   # (TB, C) one-hot mask

    neg_inf = jnp.asarray(-jnp.inf, dtype=logits.dtype)
    # True-class score and best "other" score per row (two row maxes; no
    # full-tile subtract — the margin is formed on the reduced columns).
    correct = jnp.max(jnp.where(is_true, logits, neg_inf), axis=1, keepdims=True)
    other_max = jnp.max(jnp.where(is_true, neg_inf, logits), axis=1, keepdims=True)
    margin = other_max.astype(jnp.float32) - correct.astype(jnp.float32)  # (TB, 1)
    per_sample = jnp.maximum(1.0 + margin, 0.0)                           # (TB, 1)

    # Mask rows that are only padding of the last (partial) batch tile.
    row_id = (pl.program_id(0) * block_rows
              + lax.broadcasted_iota(jnp.int32, (tb, 1), 0))
    per_sample = jnp.where(row_id < batch_size, per_sample, 0.0)

    partial_ref[...] = jnp.full(partial_ref.shape, jnp.sum(per_sample),
                                dtype=jnp.float32)


def multi_class_hinge_loss(logits, labels, *, target_tile_bytes=2 * 1024 * 1024):
    """logits: (B, C) float32/bfloat16; labels: (B,) integer class indices."""
    B, C = logits.shape
    labels2d = labels.astype(jnp.int32).reshape(B, 1)
    itemsize = logits.dtype.itemsize

    upcast = (logits.dtype == jnp.bfloat16) and not _supports_bf16_valu()

    # Generation-aware VMEM budget: explicit vmem_limit_bytes, leave headroom.
    vmem_cap = _vmem_capacity_bytes()                 # 128 MiB v5e/v6e, 64 MiB v7x
    vmem_limit = min(vmem_cap * 3 // 4, 96 * 1024 * 1024)
    budget = vmem_limit - (4 << 20)

    # Per-row VMEM bytes per grid step:
    #   2x double-buffered logits tile
    # + int32 iota (4 B) and ~2 tile-wide masked/select temporaries
    # + 2x lane-padded (128-wide) int32 label buffers.
    temp_item = 4 if (upcast or itemsize >= 4) else itemsize
    per_row = C * (2 * itemsize + 4 + 2 * temp_item) + 2 * 128 * 4
    cap_rows = max(8, (budget // per_row) // 8 * 8)

    # Tile sized by bytes (~target_tile_bytes of logits per step).
    tgt_rows = max(8, (target_tile_bytes // max(1, C * itemsize)) // 8 * 8)

    tb = min(cap_rows, tgt_rows, B)
    if B >= 8:
        tb = max(8, (tb // 8) * 8)
    # Keep enough grid steps to shard across both v7x TensorCores (and hide the
    # un-overlapped first/last DMA) whenever the batch allows >= ~8 tiles.
    if B >= 64:
        tb = min(tb, max(8, (B // 64) * 8))
    nb = pl.cdiv(B, tb)
    # TODO(synk): for very large C add a second ("arbitrary") class-axis grid
    # dimension with running-max scratch so a single row tile stays in VMEM.

    cost = pl.CostEstimate(
        flops=6 * B * C,
        transcendentals=0,
        bytes_accessed=B * C * itemsize + B * 4 + nb * 8 * 128 * 4,
    )

    partials = pl.pallas_call(
        functools.partial(_hinge_kernel, batch_size=B, block_rows=tb,
                          upcast=upcast),
        out_shape=jax.ShapeDtypeStruct((nb, 8, 128), jnp.float32),
        grid=(nb,),
        in_specs=[
            pl.BlockSpec((tb, C), lambda i: (i, 0)),
            pl.BlockSpec((tb, 1), lambda i: (i, 0)),
        ],
        out_specs=pl.BlockSpec((1, 8, 128), lambda i: (i, 0, 0)),
        compiler_params=pltpu.CompilerParams(
            dimension_semantics=("parallel",),
            vmem_limit_bytes=int(vmem_limit),
        ),
        cost_estimate=cost,
    )(logits, labels2d)

    # Finish the mean outside the kernel: sum of per-block partials / true B.
    return jnp.sum(partials[:, 0, 0]) / jnp.float32(B)


def multi_class_hinge_loss_onehot(output, target):
    """Matches the PyTorch module signature: target is a (B, C) one-hot mask."""
    labels = jnp.argmax(target.astype(jnp.int32), axis=1)
    return multi_class_hinge_loss(output, labels)


def _reference(logits, labels):
    logits = logits.astype(jnp.float32)
    _, C = logits.shape
    onehot = jax.nn.one_hot(labels, C, dtype=jnp.bool_)
    correct = jnp.max(jnp.where(onehot, logits, -jnp.inf), axis=1, keepdims=True)
    diffs = jnp.where(onehot, -jnp.inf, logits - correct)
    return jnp.mean(jnp.maximum(1.0 + jnp.max(diffs, axis=1), 0.0))


if __name__ == "__main__":
    key = jax.random.PRNGKey(0)
    k1, k2, k3, k4, k5, k6 = jax.random.split(key, 6)

    # Case 1: one-hot target (module's native signature), batch not a multiple
    # of the tile -> exercises padded-row masking and a 2-block parallel grid.
    B1, C1 = 10, 16
    logits1 = jax.random.normal(k1, (B1, C1), dtype=jnp.float32)
    labels1 = jax.random.randint(k2, (B1,), 0, C1)
    onehot1 = jax.nn.one_hot(labels1, C1, dtype=jnp.float32)
    loss1 = jax.block_until_ready(multi_class_hinge_loss_onehot(logits1, onehot1))
    ref1 = _reference(logits1, labels1)
    assert jnp.allclose(loss1, ref1, rtol=1e-5, atol=1e-5), (loss1, ref1)

    # Case 2: bf16 logits (bf16-native compute on v6e/v7x, f32 upcast on v5e).
    B2, C2 = 16, 128
    logits2 = jax.random.normal(k3, (B2, C2), dtype=jnp.float32).astype(jnp.bfloat16)
    labels2 = jax.random.randint(k4, (B2,), 0, C2)
    loss2 = jax.block_until_ready(multi_class_hinge_loss(logits2, labels2))
    ref2 = _reference(logits2, labels2)
    assert jnp.allclose(loss2, ref2, rtol=1e-3, atol=1e-3), (loss2, ref2)

    # Case 3: larger batch -> exercises the ">= ~8 grid steps" tile cap.
    B3, C3 = 96, 128
    logits3 = jax.random.normal(k5, (B3, C3), dtype=jnp.float32)
    labels3 = jax.random.randint(k6, (B3,), 0, C3)
    loss3 = jax.block_until_ready(multi_class_hinge_loss(logits3, labels3))
    ref3 = _reference(logits3, labels3)
    assert jnp.allclose(loss3, ref3, rtol=1e-5, atol=1e-5), (loss3, ref3)

    print("KERNEL_OK")
</pallas_src>

<mosaic_0001>
module attributes {stable_mosaic.version = 11 : i64} {
  func.func @_hinge_kernel(%arg0: i32, %arg1: memref<8x16xf32, #tpu.memory_space<vmem>>, %arg2: memref<8x1xi32, #tpu.memory_space<vmem>>, %arg3: memref<1x8x128xf32, #tpu.memory_space<vmem>>) attributes {dimension_semantics = [#tpu.dimension_semantics<parallel>], iteration_bounds = array<i64: 2>, scalar_prefetch = 0 : i64, scratch_operands = 0 : i64, tpu.core_type = #tpu.core_type<tc>, window_params = [{transform_indices = @transform_0, window_bounds = array<i64: 8, 16>}, {transform_indices = @transform_1, window_bounds = array<i64: 8, 1>}, {transform_indices = @transform_2, window_bounds = array<i64: 1, 8, 128>}]} {
    %c0 = arith.constant 0 : index
    %c0_0 = arith.constant 0 : index
    %0 = vector.load %arg1[%c0, %c0_0] : memref<8x16xf32, #tpu.memory_space<vmem>>, vector<8x16xf32>
    %c0_1 = arith.constant 0 : index
    %c0_2 = arith.constant 0 : index
    %1 = vector.load %arg2[%c0_1, %c0_2] : memref<8x1xi32, #tpu.memory_space<vmem>>, vector<8x1xi32>
    %2 = tpu.iota {dimensions = array<i32: 1>} : vector<8x16xi32>
    %3 = vector.broadcast %1 : vector<8x1xi32> to vector<8x16xi32>
    %4 = arith.cmpi eq, %2, %3 : vector<8x16xi32>
    %cst = arith.constant 0xFF800000 : f32
    %5 = vector.broadcast %cst : f32 to vector<8x16xf32>
    %6 = arith.select %4, %0, %5 : vector<8x16xi1>, vector<8x16xf32>
    %cst_3 = arith.constant dense<0xFF800000> : vector<8xf32>
    %7 = vector.multi_reduction <maximumf>, %6, %cst_3 [1] : vector<8x16xf32> to vector<8xf32>
    %8 = vector.shape_cast %7 : vector<8xf32> to vector<8x1xf32>
    %cst_4 = arith.constant 0xFF800000 : f32
    %9 = vector.broadcast %cst_4 : f32 to vector<8x16xf32>
    %10 = arith.select %4, %9, %0 : vector<8x16xi1>, vector<8x16xf32>
    %cst_5 = arith.constant dense<0xFF800000> : vector<8xf32>
    %11 = vector.multi_reduction <maximumf>, %10, %cst_5 [1] : vector<8x16xf32> to vector<8xf32>
    %12 = vector.shape_cast %11 : vector<8xf32> to vector<8x1xf32>
    %13 = arith.subf %12, %8 : vector<8x1xf32>
    %cst_6 = arith.constant 1.000000e+00 : f32
    %14 = vector.broadcast %cst_6 : f32 to vector<8x1xf32>
    %15 = arith.addf %14, %13 : vector<8x1xf32>
    %cst_7 = arith.constant 0.000000e+00 : f32
    %16 = vector.broadcast %cst_7 : f32 to vector<8x1xf32>
    %17 = arith.maximumf %15, %16 : vector<8x1xf32>
    %c8_i32 = arith.constant 8 : i32
    %18 = arith.muli %arg0, %c8_i32 : i32
    %19 = tpu.iota {dimensions = array<i32: 0>} : vector<8x1xi32>
    %20 = vector.broadcast %18 : i32 to vector<8x1xi32>
    %21 = arith.addi %20, %19 : vector<8x1xi32>
    %c10_i32 = arith.constant 10 : i32
    %22 = vector.broadcast %c10_i32 : i32 to vector<8x1xi32>
    %23 = arith.cmpi slt, %21, %22 : vector<8x1xi32>
    %cst_8 = arith.constant 0.000000e+00 : f32
    %24 = vector.broadcast %cst_8 : f32 to vector<8x1xf32>
    %25 = arith.select %23, %17, %24 : vector<8x1xi1>, vector<8x1xf32>
    %26 = vector.shape_cast %25 : vector<8x1xf32> to vector<1x8x1xf32>
    %cst_9 = arith.constant dense<0.000000e+00> : vector<1xf32>
    %27 = vector.multi_reduction <add>, %26, %cst_9 [1, 2] : vector<1x8x1xf32> to vector<1xf32>
    %28 = vector.shape_cast %27 : vector<1xf32> to vector<1x1x1xf32>
    %29 = vector.extract %28[0, 0, 0] : f32 from vector<1x1x1xf32>
    %30 = vector.broadcast %29 : f32 to vector<1x8x128xf32>
    %c0_10 = arith.constant 0 : index
    %c0_11 = arith.constant 0 : index
    %c0_12 = arith.constant 0 : index
    %31 = vector.load %arg3[%c0_10, %c0_11, %c0_12] : memref<1x8x128xf32, #tpu.memory_space<vmem>>, vector<1x8x128xf32>
    tpu.vector_store %arg3[%c0_10, %c0_11, %c0_12], %30 {strides = array<i32>} : memref<1x8x128xf32, #tpu.memory_space<vmem>>, vector<1x8x128xf32>,
    return
  }
  func.func @transform_0(%arg0: i32) -> (i32, i32) {
    %c0_i32 = arith.constant 0 : i32
    %c0_i32_0 = arith.constant 0 : i32
    return %arg0, %c0_i32 : i32, i32
  }
  func.func @transform_1(%arg0: i32) -> (i32, i32) {
    %c0_i32 = arith.constant 0 : i32
    %c0_i32_0 = arith.constant 0 : i32
    return %arg0, %c0_i32 : i32, i32
  }
  func.func @transform_2(%arg0: i32) -> (i32, i32, i32) {
    %c0_i32 = arith.constant 0 : i32
    %c0_i32_0 = arith.constant 0 : i32
    %c0_i32_1 = arith.constant 0 : i32
    return %arg0, %c0_i32, %c0_i32_0 : i32, i32, i32
  }
}

</mosaic_0001>

<llo_original>
// kernel: tpu_custom_call.1
$region0: #{tpu_custom_call.1}
  #allocation0 [shape = 'u32[]', space=smem, size = 0x4, offset = 0x4, fixed_abs, tag = 'smem constant byte address 0x4 - core index']
  #allocation1 [shape = 'u32[72,128]{1,0:T(1,128)}', space=vmem, size = 0x9000, scoped, tag = 'internal scratch']
  %s0 = inlined_call_operand.vmem [shape: f32[10,16], index: 0, kind: input, shape index: {}]
  %s1 = inlined_call_operand.vmem [shape: s32[10,1], index: 1, kind: input, shape index: {}]
  %s2 = inlined_call_operand.hbm [shape: f32[2,8,128], index: 2, kind: output, shape index: {}]
  %s3 = sld [smem:[#allocation0]]
  $region41: #{tpu_custom_call.1} parent=0
    _
  %s5 = ssub.s32 1, %s3
  %s6 = scalar_select 0, %s5, %s3
  $region1: #{tpu_custom_call.1} parent=0
    #allocation2 [shape = 'u8[8192]{0}', space=vmem, size = 0x2000, scoped, tag = 'output window, operand 0']
    #allocation3 [shape = 's32[2]{0}', space=sflag, size = 0x8, scoped, tag = 'scoped memory for tpu_custom_call.1']
    %7 = vsyncpa [#allocation3], 0
    %s8 = scalar_lea.sflag [#allocation3], 1
    %9 = vsyncpa %s8, 0
    loop: start=0, step=1, limit=4
    $region2: #{tpu_custom_call.1} parent=1 // loop_pre_header
      _
    $region3: #{tpu_custom_call.1} parent=1 // loop_header
      %s11 = sphi 0, %s15
      %p12 = scmp.ge.s32.totalorder %s11, 4
      %s21 = sphi 0, %s23
      %s24 = sphi 0, %s21
      %s25 = sphi 0, %s24
      %s41 = sphi 0, %s25
      %s47 = sphi 0, %s49
      %s50 = sphi 0, %s47
      %s51 = sphi 0, %s50
      %s67 = sphi 0, %s51
      %s73 = sphi 0, %s75
      %s76 = sphi 0, %s73
      %s77 = sphi 0, %s76
      %s93 = sphi 0, %s77
    $region4: #{tpu_custom_call.1} parent=1 // loop_header_branch
      %14 = sbr.rel (%p12) target = $region8
    $region5: #{tpu_custom_call.1} parent=1 // loop_body
      %s16 = ssub.s32 %s11, 1
      %s17 = ssub.s32 %s11, 2
      %s18 = sadd.s32 %s11, 1
      %s19 = ssub.s32 %s11, %s18
      %p20 = scmp.eq.s32.totalorder %s19, 0
      %s22 = sadd.s32 %s21, 1
      %s23 = scalar_select %p20, %s21, %s22
      %p26 = pneg %p20
      %p27 = scmp.eq.s32.totalorder %s11, 1
      %p28 = por %p26, %p27
      %p29 = scmp.ne.s32.totalorder %s21, %s24
      %p30 = scmp.eq.s32.totalorder %s11, 0
      %p31 = por %p29, %p30
      %p32 = scmp.ne.s32.totalorder %s21, %s24
      %p33 = scmp.eq.s32.totalorder %s16, 1
      %p34 = por %p32, %p33
      %p35 = scmp.ne.s32.totalorder %s24, %s25
      %p36 = scmp.eq.s32.totalorder %s16, 0
      %p37 = por %p35, %p36
      %p38 = scmp.ne.s32.totalorder %s24, %s25
      %p39 = scmp.eq.s32.totalorder %s17, 1
      %p40 = por %p38, %p39
      %p42 = scmp.ne.s32.totalorder %s25, %s41
      %p43 = scmp.eq.s32.totalorder %s17, 0
      %p44 = por %p42, %p43
      %s45 = ssub.s32 %s11, %s18
      %p46 = scmp.eq.s32.totalorder %s45, 0
      %s48 = sadd.s32 %s47, 1
      %s49 = scalar_select %p46, %s47, %s48
      %p52 = pneg %p46
      %p53 = scmp.eq.s32.totalorder %s11, 1
      %p54 = por %p52, %p53
      %p55 = scmp.ne.s32.totalorder %s47, %s50
      %p56 = scmp.eq.s32.totalorder %s11, 0
      %p57 = por %p55, %p56
      %p58 = scmp.ne.s32.totalorder %s47, %s50
      %p59 = scmp.eq.s32.totalorder %s16, 1
      %p60 = por %p58, %p59
      %p61 = scmp.ne.s32.totalorder %s50, %s51
      %p62 = scmp.eq.s32.totalorder %s16, 0
      %p63 = por %p61, %p62
      %p64 = scmp.ne.s32.totalorder %s50, %s51
      %p65 = scmp.eq.s32.totalorder %s17, 1
      %p66 = por %p64, %p65
      %p68 = scmp.ne.s32.totalorder %s51, %s67
      %p69 = scmp.eq.s32.totalorder %s17, 0
      %p70 = por %p68, %p69
      %s71 = ssub.s32 %s11, %s18
      %p72 = scmp.eq.s32.totalorder %s71, 0
      %s74 = sadd.s32 %s73, 1
      %s75 = scalar_select %p72, %s73, %s74
      %p78 = pneg %p72
      %p79 = scmp.eq.s32.totalorder %s11, 1
      %p80 = por %p78, %p79
      %p81 = scmp.ne.s32.totalorder %s73, %s76
      %p82 = scmp.eq.s32.totalorder %s11, 0
      %p83 = por %p81, %p82
      %p84 = scmp.ne.s32.totalorder %s73, %s76
      %p85 = scmp.eq.s32.totalorder %s16, 1
      %p86 = por %p84, %p85
      %p87 = scmp.ne.s32.totalorder %s76, %s77
      %p88 = scmp.eq.s32.totalorder %s16, 0
      %p89 = por %p87, %p88
      %p90 = scmp.ne.s32.totalorder %s76, %s77
      %p91 = scmp.eq.s32.totalorder %s17, 1
      %p92 = por %p90, %p91
      %p94 = scmp.ne.s32.totalorder %s77, %s93
      %p95 = scmp.eq.s32.totalorder %s17, 0
      %p96 = por %p94, %p95
      %p97 = scmp.le.s32.totalorder 1, %s11
      %p98 = scmp.lt.s32.totalorder %s11, 3
      %p99 = pnand %p97, %p98
      %p100 = pneg %p99
      // Predicated region
      $region9: #{tpu_custom_call.1} parent=5 // pred_check
        _
      $region10: #{tpu_custom_call.1} parent=5 // pred_check_branch
        %102 = sbr.rel (%p99) target = $region12
      $region11: #{tpu_custom_call.1} parent=5 // pred_region
        %s103 = ssub.s32 %s11, 1
      $region12: #{tpu_custom_call.1} parent=5 // pred_fallthru
        _
      %p104 = scmp.lt.s32.totalorder %s11, 2
      // Predicated region
      $region13: #{tpu_custom_call.1} parent=5 // pred_check
        %p105 = pneg %p104
      $region14: #{tpu_custom_call.1} parent=5 // pred_check_branch
        %107 = sbr.rel (%p105) target = $region16
      $region15: #{tpu_custom_call.1} parent=5 // pred_region
        // Predicated region
        $region17: #{tpu_custom_call.1} parent=15 // pred_check
          %p108 = pneg %p31
        $region18: #{tpu_custom_call.1} parent=15 // pred_check_branch
          %110 = sbr.rel (%p108) target = $region20
        $region19: #{tpu_custom_call.1} parent=15 // pred_region
          %p111 = scmp.lt.s32.totalorder %s11, 1
          %s112 = scalar_select %p111, %s11, 1
          %s113 = smul.addr %s112, 8
          %s114 = scalar_lea.vmem %s0, %s113
        $region20: #{tpu_custom_call.1} parent=15 // pred_fallthru
          _
        // Predicated region
        $region21: #{tpu_custom_call.1} parent=15 // pred_check
          %p115 = pneg %p57
        $region22: #{tpu_custom_call.1} parent=15 // pred_check_branch
          %117 = sbr.rel (%p115) target = $region24
        $region23: #{tpu_custom_call.1} parent=15 // pred_region
          %p118 = scmp.lt.s32.totalorder %s11, 1
          %s119 = scalar_select %p118, %s11, 1
          %s120 = smul.addr %s119, 8
          %s121 = scalar_lea.vmem %s1, %s120
        $region24: #{tpu_custom_call.1} parent=15 // pred_fallthru
          _
      $region16: #{tpu_custom_call.1} parent=5 // pred_fallthru
        _
      %p122 = scmp.le.s32.totalorder 1, %s11
      %p123 = scmp.lt.s32.totalorder %s11, 3
      %p124 = pnand %p122, %p123
      %p125 = pneg %p124
      // Predicated region
      $region25: #{tpu_custom_call.1} parent=5 // pred_check
        _
      $region26: #{tpu_custom_call.1} parent=5 // pred_check_branch
        %127 = sbr.rel (%p124) target = $region28
      $region27: #{tpu_custom_call.1} parent=5 // pred_region
        %s128 = ssub.s32 %s11, 1
        %p129 = scmp.lt.s32.totalorder %s16, 1
        %s130 = scalar_select %p129, %s16, 1
        %s131 = smul.addr %s130, 8
        %s132 = scalar_lea.vmem %s0, %s131
        %p133 = pneg %p37
        %p134 = pneg %p34
        %p135 = scmp.lt.s32.totalorder %s16, 1
        %s136 = scalar_select %p135, %s16, 1
        %s137 = smul.addr %s136, 8
        %s138 = scalar_lea.vmem %s1, %s137
        %p139 = pneg %p63
        %p140 = pneg %p60
        %p141 = pneg %p89
        %p142 = pneg %p86
        %s143 = sand.u32 %s76, 1
        %s144 = scalar_lea.sflag [#allocation3], %s143
        %s145 = sand.u32 %s76, 1
        %s146 = smul.addr %s145, 8
        %s147 = scalar_lea.vmem [#allocation2], %s146
        %p148 = scmp.lt.s32.totalorder %s16, 1
        %s149 = scalar_select %p148, %s16, 1
        %s150 = smul.addr %s149, 8
        %s151 = scalar_lea.vmem %s0, %s150
        %p152 = scmp.lt.s32.totalorder %s16, 1
        %s153 = scalar_select %p152, %s16, 1
        %s154 = smul.addr %s153, 8
        %s155 = scalar_lea.vmem %s1, %s154
        %v156 = vld [vmem:[%s151] sm:$0xff]
        %v157 = vld [vmem:[%s155] sm:$0xff]
        %v158 = vlaneseq
        %v159 = vand.u32 %v158, 127
        %160 = vset.pattern.permute.xlu0 0
        %161 = vperm.xlu0 %160, %v157
        %v162 = vpop.permute.xlu0 %161
        %vm163 = vcmp.eq.s32.totalorder %v159, %v162
        %v164 = vsel %vm163, %v156, -inf
        %vm165 = vcmask 130048
        %v166 = vsel %vm165, %v164, -inf
        %167 = vmax.xlane.f32.xlu0 %v166
        %v168 = vpop.xlane.xlu0 %167
        %v169 = vsel %vm163, -inf, %v156
        %v170 = vsel %vm165, %v169, -inf
        %171 = vmax.xlane.f32.xlu0 %v170
        %v172 = vpop.xlane.xlu0 %171
        %v173 = vsub.f32 %v172, %v168
        %v174 = vadd.f32 %v173, 1.0
        %v175 = vmax.f32 %v174, 0.0
        %s176 = smul.u32 %s16, 8
        %v177 = vlaneseq
        %v178 = vshrl.u32 %v177, 7
        %v179 = vstv %s176
        %v180 = vadd.s32 %v179, %v178
        %vm181 = vcmp.lt.s32.totalorder %v180, 10
        %v182 = vsel %vm181, %v175, 0.0
        %vm183 = vcmask 7168
        %v184 = vsel %vm183, %v182, 0.0
        %185 = vadd.xlane.f32.xlu0 %v184
        %v186 = vpop.xlane.xlu0 %185
        %v187 = vrot.slane %v186, 4
        %v188 = vadd.f32 %v186, %v187
        %v189 = vrot.slane %v188, 2
        %v190 = vadd.f32 %v188, %v189
        %v191 = vrot.slane %v190, 1
        %v192 = vadd.f32 %v190, %v191
        %s193 = vtos %v192
        %v194 = vstv %s193
        %195 = vst [vmem:[%s147] sm:$0xff] %v194
        %s196 = sand.u32 %s76, 1
        %s197 = scalar_lea.sflag [#allocation3], %s196
        %s198 = sand.u32 %s76, 1
        %s199 = smul.addr %s198, 8
        %s200 = scalar_lea.vmem [#allocation2], %s199
        // Predicated region
        $region29: #{tpu_custom_call.1} parent=27 // pred_check
          %p201 = pneg %p86
        $region30: #{tpu_custom_call.1} parent=27 // pred_check_branch
          %203 = sbr.rel (%p201) target = $region32
        $region31: #{tpu_custom_call.1} parent=27 // pred_region
          %205 = vsyncadd %s197, 0
          %s206 = smul.addr %s16, 8
          %s207 = scalar_lea.hbm %s2, %s206
          %s209 = sshll.u32 %s200, 4
          %s210 = int_to_ptr.vmem [resolvable:$true] %s209
          %s211 = sshll.u32 %s207, 4
          %s212 = int_to_ptr.hbm [resolvable:$true] %s211
          %214 = dma.vmem_to_hbm [thread:$0]  %s210, 128, %s212, %s197
        $region32: #{tpu_custom_call.1} parent=27 // pred_fallthru
          _
      $region28: #{tpu_custom_call.1} parent=5 // pred_fallthru
        _
      %p215 = scmp.le.s32.totalorder 2, %s11
      // Predicated region
      $region33: #{tpu_custom_call.1} parent=5 // pred_check
        %p216 = pneg %p215
      $region34: #{tpu_custom_call.1} parent=5 // pred_check_branch
        %218 = sbr.rel (%p216) target = $region36
      $region35: #{tpu_custom_call.1} parent=5 // pred_region
        %s219 = ssub.s32 %s11, 2
        // Predicated region
        $region37: #{tpu_custom_call.1} parent=35 // pred_check
          %p220 = pneg %p92
        $region38: #{tpu_custom_call.1} parent=35 // pred_check_branch
          %222 = sbr.rel (%p220) target = $region40
        $region39: #{tpu_custom_call.1} parent=35 // pred_region
          %s223 = sand.u32 %s77, 1
          %s224 = scalar_lea.sflag [#allocation3], %s223
          %s225 = sand.u32 %s77, 1
          %s226 = smul.addr %s225, 8
          %s227 = scalar_lea.vmem [#allocation2], %s226
          %229 = dma.done %s224, 128
        $region40: #{tpu_custom_call.1} parent=35 // pred_fallthru
          _
      $region36: #{tpu_custom_call.1} parent=5 // pred_fallthru
        _
    $region6: #{tpu_custom_call.1} parent=1 // loop_footer
      %s15 = sadd.s32 1, %s11
    $region7: #{tpu_custom_call.1} parent=1 // loop_footer_branch
      %10 = sbr.rel target = $region3
    $region8: #{tpu_custom_call.1} parent=1 // loop_exit
      _
    %230 = vsyncpa [#allocation3], 1
    %s231 = scalar_lea.sflag [#allocation3], 1
    %232 = vsyncpa %s231, 1

</llo_original>
